<compile_context>
chip_gen: v6e
topology: v6e:2x2x1
jax: 0.10.0
libtpu: 0.0.40
codegen_flags: <defaults>
</compile_context>

<pallas_src>
import jax
import jax.numpy as jnp
from jax.experimental import pallas as pl
from jax.experimental.pallas import tpu as pltpu


# -----------------------------------------------------------------------------
# Kernel
# -----------------------------------------------------------------------------
def _ppo_kernel(
    x_ref,        # [TB, D_in]  f32
    h_ref,        # [TB, H]     f32
    w_ih_ref,     # [D_in, 3H]  bf16   (gate order r, z, n on the lane axis)
    w_hh_ref,     # [H,    3H]  bf16
    b_ih_ref,     # [1,    3H]  f32    ([bir+bhr, biz+bhz, bin])
    b_hn_ref,     # [1,    H]   f32    (bhn, kept separate for the n gate)
    w_head_ref,   # [H,  A+1]   bf16   ([wp | wc] pre-transposed)
    b_head_ref,   # [1,  A+1]   f32    ([bp | bc])
    head_ref,     # [TB, A+1]   f32 out (policy logits | value)
    hnew_ref,     # [TB, H]     f32 out (new GRU state)
):
    H = h_ref.shape[-1]

    x = x_ref[...]                     # f32
    h = h_ref[...]                     # f32
    xb = x.astype(jnp.bfloat16)
    hb = h.astype(jnp.bfloat16)

    # --- fused GRU gate matmuls (2 MXU passes instead of 6) -------------------
    gx = jnp.dot(xb, w_ih_ref[...], preferred_element_type=jnp.float32) + b_ih_ref[...]
    gh = jnp.dot(hb, w_hh_ref[...], preferred_element_type=jnp.float32)

    r = jax.nn.sigmoid(gx[:, 0:H] + gh[:, 0:H])
    z = jax.nn.sigmoid(gx[:, H:2 * H] + gh[:, H:2 * H])
    # PyTorch GRU: n = tanh(i_n + b_in + r * (h @ Whn.T + b_hn))
    n = jnp.tanh(gx[:, 2 * H:3 * H] + r * (gh[:, 2 * H:3 * H] + b_hn_ref[...]))
    h_new = (1.0 - z) * n + z * h      # [TB, H]

    # --- fused policy + critic head (single MXU pass, lane-contiguous store) --
    head = (
        jnp.dot(h_new.astype(jnp.bfloat16), w_head_ref[...],
                preferred_element_type=jnp.float32)
        + b_head_ref[...]
    )
    head_ref[...] = head.astype(head_ref.dtype)
    hnew_ref[...] = h_new.astype(hnew_ref.dtype)


# -----------------------------------------------------------------------------
# Wrapper
# -----------------------------------------------------------------------------
def prepare_params(raw, d_in, hidden, n_actions):
    """Fuse / transpose / cast the PyTorch-convention parameters once, offline."""
    H = hidden
    w_ih = raw["weight_ih"].T.astype(jnp.bfloat16)              # [D_in, 3H]
    w_hh = raw["weight_hh"].T.astype(jnp.bfloat16)              # [H,    3H]
    b_ih = jnp.concatenate(
        [
            raw["bias_ih"][0:H] + raw["bias_hh"][0:H],           # r
            raw["bias_ih"][H:2 * H] + raw["bias_hh"][H:2 * H],   # z
            raw["bias_ih"][2 * H:3 * H],                         # n (input part only)
        ]
    )[None, :].astype(jnp.float32)                               # [1, 3H]
    b_hn = raw["bias_hh"][2 * H:3 * H][None, :].astype(jnp.float32)   # [1, H]

    w_head = jnp.concatenate([raw["wp"], raw["wc"]], axis=0).T.astype(jnp.bfloat16)  # [H, A+1]
    b_head = jnp.concatenate([raw["bp"], raw["bc"]])[None, :].astype(jnp.float32)    # [1, A+1]
    return dict(w_ih=w_ih, w_hh=w_hh, b_ih=b_ih, b_hn=b_hn, w_head=w_head, b_head=b_head)


def ppo_forward(inp, state, p, n_actions):
    """inp: [B, 1, D_in], state: [B, H] -> (policy [B, A], value [B, 1], new_state [B, H])."""
    assert inp.shape[1] == 1, "we use GRU to model the state transition for only one step"
    x = inp[:, 0, :]
    B, D_in = x.shape
    H = state.shape[1]
    A = n_actions
    H3 = 3 * H

    # Batch tiling: whole batch per block for small B, 8-row blocks otherwise.
    TB = B if (B <= 8 or B % 8 != 0) else 8
    grid = (pl.cdiv(B, TB),)

    bcast = lambda shape: pl.BlockSpec(shape, lambda i: (0, 0))
    batched = lambda shape: pl.BlockSpec(shape, lambda i: (i, 0))

    cost = pl.CostEstimate(
        flops=2 * B * (D_in * H3 + H * H3 + H * (A + 1)),
        transcendentals=3 * B * H,
        bytes_accessed=(
            4 * (B * D_in + 2 * B * H + B * (A + 1) + H3 + H + (A + 1))
            + 2 * (D_in * H3 + H * H3 + H * (A + 1))
        ),
    )

    head, h_new = pl.pallas_call(
        _ppo_kernel,
        out_shape=(
            jax.ShapeDtypeStruct((B, A + 1), jnp.float32),
            jax.ShapeDtypeStruct((B, H), jnp.float32),
        ),
        grid=grid,
        in_specs=[
            batched((TB, D_in)),        # x
            batched((TB, H)),           # h
            bcast((D_in, H3)),          # w_ih
            bcast((H, H3)),             # w_hh
            bcast((1, H3)),             # b_ih
            bcast((1, H)),              # b_hn
            bcast((H, A + 1)),          # w_head
            bcast((1, A + 1)),          # b_head
        ],
        out_specs=(
            batched((TB, A + 1)),       # policy | value slab
            batched((TB, H)),           # new state
        ),
        compiler_params=pltpu.CompilerParams(
            dimension_semantics=("parallel",),
            vmem_limit_bytes=32 * 1024 * 1024,
        ),
        cost_estimate=cost,
    )(x, state, p["w_ih"], p["w_hh"], p["b_ih"], p["b_hn"], p["w_head"], p["b_head"])

    policy = head[:, :A]
    value = head[:, A:A + 1]
    return policy, value, h_new


# -----------------------------------------------------------------------------
# Synthetic parameter init (PyTorch conventions) and pure-JAX reference
# -----------------------------------------------------------------------------
def _init_torch_style_params(key, d_in, hidden, n_actions):
    ks = jax.random.split(key, 8)
    u = lambda k, shape, s=0.1: jax.random.uniform(k, shape, jnp.float32, -s, s)
    return dict(
        weight_ih=u(ks[0], (3 * hidden, d_in)),    # gate order (r, z, n)
        weight_hh=u(ks[1], (3 * hidden, hidden)),
        bias_ih=u(ks[2], (3 * hidden,)),
        bias_hh=u(ks[3], (3 * hidden,)),
        wp=u(ks[4], (n_actions, hidden)), bp=u(ks[5], (n_actions,)),
        wc=u(ks[6], (1, hidden)),         bc=u(ks[7], (1,)),
    )


def _reference(inp, state, raw, hidden):
    """PyTorch-equation GRU + linear heads, with the same bf16 operand precision."""
    H = hidden
    bf = lambda a: a.astype(jnp.bfloat16).astype(jnp.float32)
    x = bf(inp[:, 0, :])
    hmm = bf(state)

    Wir, Wiz, Win = (raw["weight_ih"][i * H:(i + 1) * H] for i in range(3))
    Whr, Whz, Whn = (raw["weight_hh"][i * H:(i + 1) * H] for i in range(3))
    bir, biz, bin_ = (raw["bias_ih"][i * H:(i + 1) * H] for i in range(3))
    bhr, bhz, bhn = (raw["bias_hh"][i * H:(i + 1) * H] for i in range(3))

    i_r = x @ bf(Wir).T + bir; i_z = x @ bf(Wiz).T + biz; i_n = x @ bf(Win).T + bin_
    h_r = hmm @ bf(Whr).T + bhr; h_z = hmm @ bf(Whz).T + bhz; h_n = hmm @ bf(Whn).T + bhn
    r = jax.nn.sigmoid(i_r + h_r)
    z = jax.nn.sigmoid(i_z + h_z)
    n = jnp.tanh(i_n + r * h_n)
    h_new = (1.0 - z) * n + z * state
    hb = bf(h_new)
    policy = hb @ bf(raw["wp"]).T + raw["bp"]
    value = hb @ bf(raw["wc"]).T + raw["bc"]
    return policy, value, h_new


if __name__ == "__main__":
    B, D_IN, HIDDEN, N_ACTIONS = 2, 32, 32, 4

    key = jax.random.PRNGKey(0)
    k_inp, k_state, k_params = jax.random.split(key, 3)

    inp = jax.random.normal(k_inp, (B, 1, D_IN), jnp.float32)     # [B, seq=1, D_in]
    state = jax.random.normal(k_state, (B, HIDDEN), jnp.float32)  # [B, H]

    raw = _init_torch_style_params(k_params, D_IN, HIDDEN, N_ACTIONS)
    params = prepare_params(raw, D_IN, HIDDEN, N_ACTIONS)

    policy, value, new_state = ppo_forward(inp, state, params, N_ACTIONS)
    jax.block_until_ready((policy, value, new_state))

    ref_policy, ref_value, ref_state = _reference(inp, state, raw, HIDDEN)
    assert jnp.allclose(policy, ref_policy, atol=2e-3, rtol=2e-3)
    assert jnp.allclose(value, ref_value, atol=2e-3, rtol=2e-3)
    assert jnp.allclose(new_state, ref_state, atol=2e-3, rtol=2e-3)

    print("KERNEL_OK")
</pallas_src>

<mosaic_0001>
module attributes {stable_mosaic.version = 11 : i64} {
  func.func @_ppo_kernel(%arg0: i32, %arg1: memref<2x32xf32, #tpu.memory_space<vmem>>, %arg2: memref<2x32xf32, #tpu.memory_space<vmem>>, %arg3: memref<32x96xbf16, #tpu.memory_space<vmem>>, %arg4: memref<32x96xbf16, #tpu.memory_space<vmem>>, %arg5: memref<1x96xf32, #tpu.memory_space<vmem>>, %arg6: memref<1x32xf32, #tpu.memory_space<vmem>>, %arg7: memref<32x5xbf16, #tpu.memory_space<vmem>>, %arg8: memref<1x5xf32, #tpu.memory_space<vmem>>, %arg9: memref<2x5xf32, #tpu.memory_space<vmem>>, %arg10: memref<2x32xf32, #tpu.memory_space<vmem>>) attributes {dimension_semantics = [#tpu.dimension_semantics<parallel>], iteration_bounds = array<i64: 1>, scalar_prefetch = 0 : i64, scratch_operands = 0 : i64, tpu.core_type = #tpu.core_type<tc>, window_params = [{transform_indices = @transform_0, window_bounds = array<i64: 2, 32>}, {transform_indices = @transform_1, window_bounds = array<i64: 2, 32>}, {pipeline_mode = #tpu.pipeline_mode<synchronous>, transform_indices = @transform_2, window_bounds = array<i64: 32, 96>}, {pipeline_mode = #tpu.pipeline_mode<synchronous>, transform_indices = @transform_3, window_bounds = array<i64: 32, 96>}, {pipeline_mode = #tpu.pipeline_mode<synchronous>, transform_indices = @transform_4, window_bounds = array<i64: 1, 96>}, {pipeline_mode = #tpu.pipeline_mode<synchronous>, transform_indices = @transform_5, window_bounds = array<i64: 1, 32>}, {pipeline_mode = #tpu.pipeline_mode<synchronous>, transform_indices = @transform_6, window_bounds = array<i64: 32, 5>}, {pipeline_mode = #tpu.pipeline_mode<synchronous>, transform_indices = @transform_7, window_bounds = array<i64: 1, 5>}, {transform_indices = @transform_8, window_bounds = array<i64: 2, 5>}, {transform_indices = @transform_9, window_bounds = array<i64: 2, 32>}]} {
    %c0 = arith.constant 0 : index
    %c0_0 = arith.constant 0 : index
    %0 = vector.load %arg1[%c0, %c0_0] : memref<2x32xf32, #tpu.memory_space<vmem>>, vector<2x32xf32>
    %c0_1 = arith.constant 0 : index
    %c0_2 = arith.constant 0 : index
    %1 = vector.load %arg2[%c0_1, %c0_2] : memref<2x32xf32, #tpu.memory_space<vmem>>, vector<2x32xf32>
    %2 = arith.truncf %0 : vector<2x32xf32> to vector<2x32xbf16>
    %3 = arith.truncf %1 : vector<2x32xf32> to vector<2x32xbf16>
    %c0_3 = arith.constant 0 : index
    %c0_4 = arith.constant 0 : index
    %4 = vector.load %arg3[%c0_3, %c0_4] : memref<32x96xbf16, #tpu.memory_space<vmem>>, vector<32x96xbf16>
    %cst = arith.constant dense<0.000000e+00> : vector<2x96xf32>
    %5 = tpu.matmul %2, %4, %cst {dimension_numbers = #tpu.dot_dimension_numbers<[1], [0], [0], [1], [0, 0, 1, 1], [], []>} : vector<2x32xbf16>, vector<32x96xbf16>, vector<2x96xf32> -> vector<2x96xf32>
    %c0_5 = arith.constant 0 : index
    %c0_6 = arith.constant 0 : index
    %6 = vector.load %arg5[%c0_5, %c0_6] : memref<1x96xf32, #tpu.memory_space<vmem>>, vector<1x96xf32>
    %7 = vector.broadcast %6 : vector<1x96xf32> to vector<2x96xf32>
    %8 = arith.addf %5, %7 : vector<2x96xf32>
    %c0_7 = arith.constant 0 : index
    %c0_8 = arith.constant 0 : index
    %9 = vector.load %arg4[%c0_7, %c0_8] : memref<32x96xbf16, #tpu.memory_space<vmem>>, vector<32x96xbf16>
    %cst_9 = arith.constant dense<0.000000e+00> : vector<2x96xf32>
    %10 = tpu.matmul %3, %9, %cst_9 {dimension_numbers = #tpu.dot_dimension_numbers<[1], [0], [0], [1], [0, 0, 1, 1], [], []>} : vector<2x32xbf16>, vector<32x96xbf16>, vector<2x96xf32> -> vector<2x96xf32>
    %11 = vector.extract_strided_slice %8 {offsets = [0, 0], sizes = [2, 32], strides = [1, 1]} : vector<2x96xf32> to vector<2x32xf32>
    %12 = vector.extract_strided_slice %10 {offsets = [0, 0], sizes = [2, 32], strides = [1, 1]} : vector<2x96xf32> to vector<2x32xf32>
    %13 = arith.addf %11, %12 : vector<2x32xf32>
    %14 = arith.negf %13 : vector<2x32xf32>
    %15 = math.exp %14 : vector<2x32xf32>
    %cst_10 = arith.constant 1.000000e+00 : f32
    %16 = vector.broadcast %cst_10 : f32 to vector<2x32xf32>
    %17 = arith.addf %16, %15 : vector<2x32xf32>
    %18 = arith.divf %16, %17 : vector<2x32xf32>
    %19 = vector.extract_strided_slice %8 {offsets = [0, 32], sizes = [2, 32], strides = [1, 1]} : vector<2x96xf32> to vector<2x32xf32>
    %20 = vector.extract_strided_slice %10 {offsets = [0, 32], sizes = [2, 32], strides = [1, 1]} : vector<2x96xf32> to vector<2x32xf32>
    %21 = arith.addf %19, %20 : vector<2x32xf32>
    %22 = arith.negf %21 : vector<2x32xf32>
    %23 = math.exp %22 : vector<2x32xf32>
    %cst_11 = arith.constant 1.000000e+00 : f32
    %24 = vector.broadcast %cst_11 : f32 to vector<2x32xf32>
    %25 = arith.addf %24, %23 : vector<2x32xf32>
    %26 = arith.divf %24, %25 : vector<2x32xf32>
    %27 = vector.extract_strided_slice %8 {offsets = [0, 64], sizes = [2, 32], strides = [1, 1]} : vector<2x96xf32> to vector<2x32xf32>
    %28 = vector.extract_strided_slice %10 {offsets = [0, 64], sizes = [2, 32], strides = [1, 1]} : vector<2x96xf32> to vector<2x32xf32>
    %c0_12 = arith.constant 0 : index
    %c0_13 = arith.constant 0 : index
    %29 = vector.load %arg6[%c0_12, %c0_13] : memref<1x32xf32, #tpu.memory_space<vmem>>, vector<1x32xf32>
    %30 = vector.broadcast %29 : vector<1x32xf32> to vector<2x32xf32>
    %31 = arith.addf %28, %30 : vector<2x32xf32>
    %32 = arith.mulf %18, %31 : vector<2x32xf32>
    %33 = arith.addf %27, %32 : vector<2x32xf32>
    %34 = math.tanh %33 : vector<2x32xf32>
    %cst_14 = arith.constant 1.000000e+00 : f32
    %35 = vector.broadcast %cst_14 : f32 to vector<2x32xf32>
    %36 = arith.subf %35, %26 : vector<2x32xf32>
    %37 = arith.mulf %36, %34 : vector<2x32xf32>
    %38 = arith.mulf %26, %1 : vector<2x32xf32>
    %39 = arith.addf %37, %38 : vector<2x32xf32>
    %40 = arith.truncf %39 : vector<2x32xf32> to vector<2x32xbf16>
    %c0_15 = arith.constant 0 : index
    %c0_16 = arith.constant 0 : index
    %41 = vector.load %arg7[%c0_15, %c0_16] : memref<32x5xbf16, #tpu.memory_space<vmem>>, vector<32x5xbf16>
    %cst_17 = arith.constant dense<0.000000e+00> : vector<2x5xf32>
    %42 = tpu.matmul %40, %41, %cst_17 {dimension_numbers = #tpu.dot_dimension_numbers<[1], [0], [0], [1], [0, 0, 1, 1], [], []>} : vector<2x32xbf16>, vector<32x5xbf16>, vector<2x5xf32> -> vector<2x5xf32>
    %c0_18 = arith.constant 0 : index
    %c0_19 = arith.constant 0 : index
    %43 = vector.load %arg8[%c0_18, %c0_19] : memref<1x5xf32, #tpu.memory_space<vmem>>, vector<1x5xf32>
    %44 = vector.broadcast %43 : vector<1x5xf32> to vector<2x5xf32>
    %45 = arith.addf %42, %44 : vector<2x5xf32>
    %c0_20 = arith.constant 0 : index
    %c0_21 = arith.constant 0 : index
    %46 = vector.load %arg9[%c0_20, %c0_21] : memref<2x5xf32, #tpu.memory_space<vmem>>, vector<2x5xf32>
    tpu.vector_store %arg9[%c0_20, %c0_21], %45 {strides = array<i32>} : memref<2x5xf32, #tpu.memory_space<vmem>>, vector<2x5xf32>,
    %c0_22 = arith.constant 0 : index
    %c0_23 = arith.constant 0 : index
    %47 = vector.load %arg10[%c0_22, %c0_23] : memref<2x32xf32, #tpu.memory_space<vmem>>, vector<2x32xf32>
    tpu.vector_store %arg10[%c0_22, %c0_23], %39 {strides = array<i32>} : memref<2x32xf32, #tpu.memory_space<vmem>>, vector<2x32xf32>,
    return
  }
  func.func @transform_0(%arg0: i32) -> (i32, i32) {
    %c0_i32 = arith.constant 0 : i32
    %c0_i32_0 = arith.constant 0 : i32
    return %arg0, %c0_i32 : i32, i32
  }
  func.func @transform_1(%arg0: i32) -> (i32, i32) {
    %c0_i32 = arith.constant 0 : i32
    %c0_i32_0 = arith.constant 0 : i32
    return %arg0, %c0_i32 : i32, i32
  }
  func.func @transform_2(%arg0: i32) -> (i32, i32) {
    %c0_i32 = arith.constant 0 : i32
    %c0_i32_0 = arith.constant 0 : i32
    %c0_i32_1 = arith.constant 0 : i32
    return %c0_i32, %c0_i32_0 : i32, i32
  }
  func.func @transform_3(%arg0: i32) -> (i32, i32) {
    %c0_i32 = arith.constant 0 : i32
    %c0_i32_0 = arith.constant 0 : i32
    %c0_i32_1 = arith.constant 0 : i32
    return %c0_i32, %c0_i32_0 : i32, i32
  }
  func.func @transform_4(%arg0: i32) -> (i32, i32) {
    %c0_i32 = arith.constant 0 : i32
    %c0_i32_0 = arith.constant 0 : i32
    %c0_i32_1 = arith.constant 0 : i32
    return %c0_i32, %c0_i32_0 : i32, i32
  }
  func.func @transform_5(%arg0: i32) -> (i32, i32) {
    %c0_i32 = arith.constant 0 : i32
    %c0_i32_0 = arith.constant 0 : i32
    %c0_i32_1 = arith.constant 0 : i32
    return %c0_i32, %c0_i32_0 : i32, i32
  }
  func.func @transform_6(%arg0: i32) -> (i32, i32) {
    %c0_i32 = arith.constant 0 : i32
    %c0_i32_0 = arith.constant 0 : i32
    %c0_i32_1 = arith.constant 0 : i32
    return %c0_i32, %c0_i32_0 : i32, i32
  }
  func.func @transform_7(%arg0: i32) -> (i32, i32) {
    %c0_i32 = arith.constant 0 : i32
    %c0_i32_0 = arith.constant 0 : i32
    %c0_i32_1 = arith.constant 0 : i32
    return %c0_i32, %c0_i32_0 : i32, i32
  }
  func.func @transform_8(%arg0: i32) -> (i32, i32) {
    %c0_i32 = arith.constant 0 : i32
    %c0_i32_0 = arith.constant 0 : i32
    return %arg0, %c0_i32 : i32, i32
  }
  func.func @transform_9(%arg0: i32) -> (i32, i32) {
    %c0_i32 = arith.constant 0 : i32
    %c0_i32_0 = arith.constant 0 : i32
    return %arg0, %c0_i32 : i32, i32
  }
}

</mosaic_0001>

<llo_original>
// kernel: tpu_custom_call.1
$region0: #{tpu_custom_call.1}
  #allocation0 [shape = 'u32[]', space=smem, size = 0x4, offset = 0x4, fixed_abs, tag = 'smem constant byte address 0x4 - core index']
  #allocation1 [shape = 'u32[144,128]{1,0:T(1,128)}', space=vmem, size = 0x12000, scoped, tag = 'internal scratch']
  %s0 = inlined_call_operand.vmem [shape: f32[2,32], index: 0, kind: input, shape index: {}]
  %s1 = inlined_call_operand.vmem [shape: f32[2,32], index: 1, kind: input, shape index: {}]
  %s2 = inlined_call_operand.vmem [shape: bf16[32,96], index: 2, kind: input, shape index: {}]
  %s3 = inlined_call_operand.hbm [shape: bf16[32,96], index: 3, kind: input, shape index: {}]
  %s4 = inlined_call_operand.vmem [shape: f32[1,96], index: 4, kind: input, shape index: {}]
  %s5 = inlined_call_operand.vmem [shape: f32[1,32], index: 5, kind: input, shape index: {}]
  %s6 = inlined_call_operand.vmem [shape: bf16[32,5], index: 6, kind: input, shape index: {}]
  %s7 = inlined_call_operand.vmem [shape: f32[1,5], index: 7, kind: input, shape index: {}]
  %s8 = inlined_call_operand.hbm [shape: f32[2,5], index: 8, kind: output, shape index: {0}]
  %s9 = inlined_call_operand.hbm [shape: f32[2,32], index: 9, kind: output, shape index: {1}]
  %10 = xla_tuple %s8, %s9
  %s11 = sld [smem:[#allocation0]]
  $region54: #{tpu_custom_call.1} parent=0
    _
  %s13 = ssub.s32 1, %s11
  %s14 = scalar_select 0, %s13, %s11
  $region1: #{tpu_custom_call.1} parent=0
    #allocation2 [shape = 'u8[8192]{0}', space=vmem, size = 0x2000, scoped, tag = 'input window, operand 3, single buffered']
    #allocation3 [shape = 's32[1]{0}', space=sflag, size = 0x4, scoped, tag = 'scoped memory for tpu_custom_call.1']
    #allocation4 [shape = 's32[1]{0}', space=sflag, size = 0x4, scoped, tag = 'scoped memory for tpu_custom_call.1']
    #allocation5 [shape = 'u8[1024]{0}', space=vmem, size = 0x400, scoped, tag = 'output window, operand 0, single buffered']
    #allocation6 [shape = 'u8[1024]{0}', space=vmem, size = 0x400, scoped, tag = 'output window, operand 1, single buffered']
    #allocation7 [shape = 's32[1]{0}', space=sflag, size = 0x4, scoped, tag = 'scoped memory for tpu_custom_call.1']
    %15 = vsyncpa [#allocation3], 0
    %16 = vsyncpa [#allocation4], 0
    %17 = vsyncpa [#allocation7], 0
    // Predicated region
    $region2: #{tpu_custom_call.1} parent=1 // pred_check
      _
    $region3: #{tpu_custom_call.1} parent=1 // pred_check_branch
      %19 = sbr.rel (0) target = $region5
    $region4: #{tpu_custom_call.1} parent=1 // pred_region
      _
    $region5: #{tpu_custom_call.1} parent=1 // pred_fallthru
      _
    // Predicated region
    $region6: #{tpu_custom_call.1} parent=1 // pred_check
      _
    $region7: #{tpu_custom_call.1} parent=1 // pred_check_branch
      %21 = sbr.rel (0) target = $region9
    $region8: #{tpu_custom_call.1} parent=1 // pred_region
      _
    $region9: #{tpu_custom_call.1} parent=1 // pred_fallthru
      _
    // Predicated region
    $region10: #{tpu_custom_call.1} parent=1 // pred_check
      _
    $region11: #{tpu_custom_call.1} parent=1 // pred_check_branch
      %23 = sbr.rel (0) target = $region13
    $region12: #{tpu_custom_call.1} parent=1 // pred_region
      _
    $region13: #{tpu_custom_call.1} parent=1 // pred_fallthru
      _
    // Predicated region
    $region14: #{tpu_custom_call.1} parent=1 // pred_check
      _
    $region15: #{tpu_custom_call.1} parent=1 // pred_check_branch
      %25 = sbr.rel (0) target = $region17
    $region16: #{tpu_custom_call.1} parent=1 // pred_region
      %s27 = ssub.s32 256, 256
      %28 = vsyncadd [#allocation3], %s27
      %s29 = sshll.u32 [#allocation2], 4
      %s30 = int_to_ptr.vmem [resolvable:$true] %s29
      %35 = dma.hbm_to_vmem [thread:$0]  %s3, 256, %s30, [#allocation3], 64, 64, 4
    $region17: #{tpu_custom_call.1} parent=1 // pred_fallthru
      _
    // Predicated region
    $region18: #{tpu_custom_call.1} parent=1 // pred_check
      _
    $region19: #{tpu_custom_call.1} parent=1 // pred_check_branch
      %37 = sbr.rel (0) target = $region21
    $region20: #{tpu_custom_call.1} parent=1 // pred_region
      _
    $region21: #{tpu_custom_call.1} parent=1 // pred_fallthru
      _
    // Predicated region
    $region22: #{tpu_custom_call.1} parent=1 // pred_check
      _
    $region23: #{tpu_custom_call.1} parent=1 // pred_check_branch
      %39 = sbr.rel (0) target = $region25
    $region24: #{tpu_custom_call.1} parent=1 // pred_region
      _
    $region25: #{tpu_custom_call.1} parent=1 // pred_fallthru
      _
    // Predicated region
    $region26: #{tpu_custom_call.1} parent=1 // pred_check
      _
    $region27: #{tpu_custom_call.1} parent=1 // pred_check_branch
      %41 = sbr.rel (0) target = $region29
    $region28: #{tpu_custom_call.1} parent=1 // pred_region
      _
    $region29: #{tpu_custom_call.1} parent=1 // pred_fallthru
      _
    // Predicated region
    $region30: #{tpu_custom_call.1} parent=1 // pred_check
      _
    $region31: #{tpu_custom_call.1} parent=1 // pred_check_branch
      %43 = sbr.rel (0) target = $region33
    $region32: #{tpu_custom_call.1} parent=1 // pred_region
      _
    $region33: #{tpu_custom_call.1} parent=1 // pred_fallthru
      _
    // Predicated region
    $region34: #{tpu_custom_call.1} parent=1 // pred_check
      _
    $region35: #{tpu_custom_call.1} parent=1 // pred_check_branch
      %45 = sbr.rel (0) target = $region37
    $region36: #{tpu_custom_call.1} parent=1 // pred_region
      %46 = dma.done [#allocation3], 256
    $region37: #{tpu_custom_call.1} parent=1 // pred_fallthru
      _
    %v48 = vld [vmem:[%s0] sm:$0x3]
    %v49 = vld [vmem:[%s1] sm:$0x3]
    %v50 = vpack.c.bf16 %v48, %v48
    %v51 = vpack.c.bf16 %v49, %v49
    %v52 = vld [vmem:[%s2] sm:$0xf]
    %v53 = vld [vmem:[%s2 + $0x4] sm:$0xf]
    %v54 = vld [vmem:[%s2 + $0x8] sm:$0xf]
    %v55 = vld [vmem:[%s2 + $0xc] sm:$0xf]
    %v56 = vld [vmem:[%s4] sm:$0x1]
    %v58 = vlaneseq
    %v59 = vshrl.u32 %v58, 7
    %v60 = vsub.s32 0, %v59
    %v61 = vrot.slane %v56, %v60
    %v67 = vunpack.c.l.b16 %v52
    %v68 = vunpack.c.l.b16 %v53
    %v69 = vunpack.c.l.b16 %v54
    %v70 = vunpack.c.l.b16 %v55
    %v71 = vpack.c.b16 %v68, %v67
    %v72 = vpack.c.b16 %v70, %v69
    %vm75 = vcmask 261120
    %v77 = vsel %vm75, %v50, 0
    %79 = vmatprep.subr.bf16.mxu0 0
    %80 = vmatpush1.bf16.msra.mxu0 0
    %81 = vmatprep.subr.bf16.mxu0 0
    %82 = vmatpush1.bf16.msra.mxu0 0
    %83 = vmatprep.subr.bf16.mxu0 0
    %84 = vmatpush1.bf16.msra.mxu0 0
    %85 = vmatprep.subr.bf16.mxu0 0
    %86 = vmatpush1.bf16.msra.mxu0 0
    %87 = vmatprep.subr.bf16.mxu0 0
    %88 = vmatpush1.bf16.msra.mxu0 0
    %89 = vmatprep.subr.bf16.mxu0 0
    %90 = vmatpush1.bf16.msra.mxu0 0
    %91 = vmatprep.subr.bf16.mxu0 0
    %92 = vmatpush1.bf16.msra.mxu0 %v72
    %93 = vmatprep.subr.bf16.mxu0 0
    %94 = vmatpush1.bf16.msra.mxu0 %v71
    %95 = vmatprep.subr.bf16.mxu0 0
    %96 = vmatpush2.bf16.msra.mxu0 0
    %97 = vmatprep.subr.bf16.mxu0 0
    %98 = vmatpush2.bf16.msra.mxu0 0
    %99 = vmatprep.subr.bf16.mxu0 0
    %100 = vmatpush2.bf16.msra.mxu0 0
    %101 = vmatprep.subr.bf16.mxu0 0
    %102 = vmatpush2.bf16.msra.mxu0 0
    %103 = vmatprep.subr.bf16.mxu0 0
    %104 = vmatpush2.bf16.msra.mxu0 0
    %105 = vmatprep.subr.bf16.mxu0 0
    %106 = vmatpush2.bf16.msra.mxu0 0
    %107 = vmatprep.subr.bf16.mxu0 0
    %108 = vmatpush2.bf16.msra.mxu0 0
    %109 = vmatprep.subr.bf16.mxu0 0
    %110 = vmatpush2.bf16.msra.mxu0 0
    %111 = vmatprep.mubr.bf16.mxu0 0
    %112 = vmatmul.mubr.bf16.gmra.mxu0 %v77
    %v113 = vpop.f32.mrf.mxu0
    %v114 = vadd.f32 %v61, %v113
    %v115 = vpop.f32.mrf.mxu0
    %v116 = vpop.f32.mrf.mxu0
    %v117 = vpop.f32.mrf.mxu0
    %118 = vdwg.mxu0
    %v119 = vld [vmem:[#allocation2] sm:$0xf]
    %v120 = vld [vmem:[#allocation2 + $0x4] sm:$0xf]
    %v121 = vld [vmem:[#allocation2 + $0x8] sm:$0xf]
    %v122 = vld [vmem:[#allocation2 + $0xc] sm:$0xf]
    %v127 = vunpack.c.l.b16 %v119
    %v128 = vunpack.c.l.b16 %v120
    %v129 = vunpack.c.l.b16 %v121
    %v130 = vunpack.c.l.b16 %v122
    %v131 = vpack.c.b16 %v128, %v127
    %v132 = vpack.c.b16 %v130, %v129
    %v136 = vsel %vm75, %v51, 0
    %138 = vmatprep.subr.bf16.mxu0 0
    %139 = vmatpush1.bf16.msra.mxu0 0
    %140 = vmatprep.subr.bf16.mxu0 0
    %141 = vmatpush1.bf16.msra.mxu0 0
    %142 = vmatprep.subr.bf16.mxu0 0
    %143 = vmatpush1.bf16.msra.mxu0 0
    %144 = vmatprep.subr.bf16.mxu0 0
    %145 = vmatpush1.bf16.msra.mxu0 0
    %146 = vmatprep.subr.bf16.mxu0 0
    %147 = vmatpush1.bf16.msra.mxu0 0
    %148 = vmatprep.subr.bf16.mxu0 0
    %149 = vmatpush1.bf16.msra.mxu0 0
    %150 = vmatprep.subr.bf16.mxu0 0
    %151 = vmatpush1.bf16.msra.mxu0 %v132
    %152 = vmatprep.subr.bf16.mxu0 0
    %153 = vmatpush1.bf16.msra.mxu0 %v131
    %154 = vmatprep.subr.bf16.mxu0 0
    %155 = vmatpush2.bf16.msra.mxu0 0
    %156 = vmatprep.subr.bf16.mxu0 0
    %157 = vmatpush2.bf16.msra.mxu0 0
    %158 = vmatprep.subr.bf16.mxu0 0
    %159 = vmatpush2.bf16.msra.mxu0 0
    %160 = vmatprep.subr.bf16.mxu0 0
    %161 = vmatpush2.bf16.msra.mxu0 0
    %162 = vmatprep.subr.bf16.mxu0 0
    %163 = vmatpush2.bf16.msra.mxu0 0
    %164 = vmatprep.subr.bf16.mxu0 0
    %165 = vmatpush2.bf16.msra.mxu0 0
    %166 = vmatprep.subr.bf16.mxu0 0
    %167 = vmatpush2.bf16.msra.mxu0 0
    %168 = vmatprep.subr.bf16.mxu0 0
    %169 = vmatpush2.bf16.msra.mxu0 0
    %170 = vmatprep.mubr.bf16.mxu0 0
    %171 = vmatmul.mubr.bf16.gmra.mxu0 %v136
    %v172 = vpop.f32.mrf.mxu0
    %v173 = vadd.f32 0.0, %v172
    %v174 = vpop.f32.mrf.mxu0
    %v175 = vpop.f32.mrf.mxu0
    %v176 = vpop.f32.mrf.mxu0
    %177 = vdwg.mxu0
    %v178 = vadd.f32 %v114, %v173
    %v179 = vxor.u32 %v178, 2147483648
    %v180 = vmul.f32 %v179, 1.442695
    %v181 = vpow.pop %v180
    %v182 = vadd.f32 %v181, 1.0
    %v183 = vrcp.pop %v182
    %v184 = vmul.f32 1.0, %v183
    %v185 = vld [vmem:[%s5] sm:$0x1]
    %v187 = vlaneseq
    %v188 = vshrl.u32 %v187, 7
    %v189 = vsub.s32 0, %v188
    %v190 = vrot.slane %v185, %v189
    %191 = vrot.lane.b32.xlu0 %v190, 64
    %v192 = vpop.permute.xlu0 %191
    %v194 = vadd.f32 %v173, %v192
    %196 = vrot.lane.b32.xlu0 %v194, 64
    %v197 = vpop.permute.xlu0 %196
    %v199 = vmul.f32 %v184, %v197
    %201 = vrot.lane.b32.xlu0 %v199, 64
    %v202 = vpop.permute.xlu0 %201
    %v204 = vadd.f32 %v114, %v202
    %v205 = vtanh.pop %v204
    %v206 = vsub.f32 1.0, %v184
    %208 = vrot.lane.b32.xlu0 %v205, 96
    %v209 = vpop.permute.xlu0 %208
    %v211 = vmul.f32 %v206, %v209
    %213 = vrot.lane.b32.xlu0 %v49, 32
    %v214 = vpop.permute.xlu0 %213
    %v216 = vmul.f32 %v184, %v214
    %v217 = vadd.f32 %v211, %v216
    %v218 = vpack.c.bf16 %v217, %v217
    %v219 = vld [vmem:[%s6] sm:$0xf]
    %v220 = vld [vmem:[%s6 + $0x4] sm:$0xf]
    %v221 = vld [vmem:[%s6 + $0x8] sm:$0xf]
    %v222 = vld [vmem:[%s6 + $0xc] sm:$0xf]
    %v223 = vld [vmem:[%s7] sm:$0x1]
    %v225 = vlaneseq
    %v226 = vshrl.u32 %v225, 7
    %v227 = vsub.s32 0, %v226
    %v228 = vrot.slane %v223, %v227
    %231 = vrot.lane.b32.xlu0 %v218, 96
    %v232 = vpop.permute.xlu0 %231
    %v237 = vunpack.c.l.b16 %v219
    %v238 = vunpack.c.l.b16 %v220
    %v239 = vunpack.c.l.b16 %v221
    %v240 = vunpack.c.l.b16 %v222
    %v241 = vpack.c.b16 %v238, %v237
    %v242 = vpack.c.b16 %v240, %v239
    %v246 = vsel %vm75, %v232, 0
    %248 = vmatprep.subr.bf16.mxu0 0
    %249 = vmatpush1.bf16.msra.mxu0 0
    %250 = vmatprep.subr.bf16.mxu0 0
    %251 = vmatpush1.bf16.msra.mxu0 0
    %252 = vmatprep.subr.bf16.mxu0 0
    %253 = vmatpush1.bf16.msra.mxu0 0
    %254 = vmatprep.subr.bf16.mxu0 0
    %255 = vmatpush1.bf16.msra.mxu0 0
    %256 = vmatprep.subr.bf16.mxu0 0
    %257 = vmatpush1.bf16.msra.mxu0 0
    %258 = vmatprep.subr.bf16.mxu0 0
    %259 = vmatpush1.bf16.msra.mxu0 0
    %260 = vmatprep.subr.bf16.mxu0 0
    %261 = vmatpush1.bf16.msra.mxu0 %v242
    %262 = vmatprep.subr.bf16.mxu0 0
    %263 = vmatpush1.bf16.msra.mxu0 %v241
    %264 = vmatprep.subr.bf16.mxu0 0
    %265 = vmatpush2.bf16.msra.mxu0 0
    %266 = vmatprep.subr.bf16.mxu0 0
    %267 = vmatpush2.bf16.msra.mxu0 0
    %268 = vmatprep.subr.bf16.mxu0 0
    %269 = vmatpush2.bf16.msra.mxu0 0
    %270 = vmatprep.subr.bf16.mxu0 0
    %271 = vmatpush2.bf16.msra.mxu0 0
    %272 = vmatprep.subr.bf16.mxu0 0
    %273 = vmatpush2.bf16.msra.mxu0 0
    %274 = vmatprep.subr.bf16.mxu0 0
    %275 = vmatpush2.bf16.msra.mxu0 0
    %276 = vmatprep.subr.bf16.mxu0 0
    %277 = vmatpush2.bf16.msra.mxu0 0
    %278 = vmatprep.subr.bf16.mxu0 0
    %279 = vmatpush2.bf16.msra.mxu0 0
    %280 = vmatprep.mubr.bf16.mxu0 0
    %281 = vmatmul.mubr.bf16.gmra.mxu0 %v246
    %v282 = vpop.f32.mrf.mxu0
    %v283 = vadd.f32 %v228, %v282
    %v284 = vpop.f32.mrf.mxu0
    %v285 = vpop.f32.mrf.mxu0
    %v286 = vpop.f32.mrf.mxu0
    %287 = vdwg.mxu0
    %vm288 = vcmask 33792
    %289 = vst.msk [vmem:[#allocation5] sm:$0x3] %vm288, %v283
    %291 = vrot.lane.b32.xlu0 %v217, 96
    %v292 = vpop.permute.xlu0 %291
    %vm294 = vcmask 254976
    %295 = vst.msk [vmem:[#allocation6] sm:$0x3] %vm294, %v292
    // Predicated region
    $region38: #{tpu_custom_call.1} parent=1 // pred_check
      _
    $region39: #{tpu_custom_call.1} parent=1 // pred_check_branch
      %297 = sbr.rel (0) target = $region41
    $region40: #{tpu_custom_call.1} parent=1 // pred_region
      %s299 = ssub.s32 32, 32
      %300 = vsyncadd [#allocation4], %s299
      %s302 = sshll.u32 [#allocation5], 4
      %s303 = int_to_ptr.vmem [resolvable:$true] %s302
      %305 = dma.vmem_to_hbm [thread:$0]  %s303, 32, %s8, [#allocation4]
    $region41: #{tpu_custom_call.1} parent=1 // pred_fallthru
      _
    // Predicated region
    $region42: #{tpu_custom_call.1} parent=1 // pred_check
      _
    $region43: #{tpu_custom_call.1} parent=1 // pred_check_branch
      %307 = sbr.rel (0) target = $region45
    $region44: #{tpu_custom_call.1} parent=1 // pred_region
      %s309 = ssub.s32 32, 32
      %310 = vsyncadd [#allocation7], %s309
      %s312 = sshll.u32 [#allocation6], 4
      %s313 = int_to_ptr.vmem [resolvable:$true] %s312
      %315 = dma.vmem_to_hbm [thread:$0]  %s313, 32, %s9, [#allocation7]
    $region45: #{tpu_custom_call.1} parent=1 // pred_fallthru
      _
    // Predicated region
    $region46: #{tpu_custom_call.1} parent=1 // pred_check
      _
    $region47: #{tpu_custom_call.1} parent=1 // pred_check_branch
      %317 = sbr.rel (0) target = $region49
    $region48: #{tpu_custom_call.1} parent=1 // pred_region
      %318 = dma.done [#allocation4], 32
    $region49: #{tpu_custom_call.1} parent=1 // pred_fallthru
      _
    // Predicated region
    $region50: #{tpu_custom_call.1} parent=1 // pred_check
      _
    $region51: #{tpu_custom_call.1} parent=1 // pred_check_branch
      %320 = sbr.rel (0) target = $region53
    $region52: #{tpu_custom_call.1} parent=1 // pred_region
      %321 = dma.done [#allocation7], 32
    $region53: #{tpu_custom_call.1} parent=1 // pred_fallthru
      _
    %322 = vsyncpa [#allocation3], 1
    %323 = vsyncpa [#allocation4], 1
    %324 = vsyncpa [#allocation7], 1

</llo_original>
